<compile_context>
chip_gen: v6e
topology: v6e:2x2x1
jax: 0.10.0
libtpu: 0.0.40
codegen_flags: <defaults>
</compile_context>

<pallas_src>
import math

import numpy as np

import jax
import jax.numpy as jnp
from jax.experimental import pallas as pl
from jax.experimental.pallas import tpu as pltpu


# ----------------------------------------------------------------------------
# Host-side precompute of the bicubic resize weight matrices.
# ----------------------------------------------------------------------------
def _cubic_aa_filter(x: float) -> float:
    """Keys cubic convolution kernel, A = -0.5 (ATen antialias-path filter)."""
    A = -0.5
    x = abs(x)
    if x < 1.0:
        return ((A + 2.0) * x - (A + 3.0)) * x * x + 1.0
    if x < 2.0:
        return (((x - 5.0) * x + 8.0) * x - 4.0) * A
    return 0.0


def resize_weight_matrix(in_size: int, out_size: int) -> np.ndarray:
    """Dense (out_size, in_size) row-normalized bicubic resize weights.

    Matches ATen's _upsample_bicubic2d_aa with align_corners=True:
      scale = (in-1)/(out-1), center = i*scale, Keys cubic A=-0.5,
      antialias widening only when scale > 1 (downscale), window clipped to
      the input and renormalized at the borders.
    """
    scale = (in_size - 1) / (out_size - 1) if out_size > 1 else 0.0
    support = 2.0 * scale if scale > 1.0 else 2.0
    invscale = 1.0 / scale if scale > 1.0 else 1.0

    W = np.zeros((out_size, in_size), dtype=np.float64)
    for i in range(out_size):
        center = scale * i
        xmin = max(int(center - support + 1.0), 0)
        xmax = min(int(center + support + 1.0), in_size)
        w = np.array([_cubic_aa_filter((k - center) * invscale)
                      for k in range(xmin, xmax)], dtype=np.float64)
        tot = w.sum()
        # Guard: bias folding after the resize is exact only if every row sums
        # to 1 (always true for non-degenerate sizes).
        assert tot > 0.0, "degenerate resize row; bias folding would be invalid"
        W[i, xmin:xmax] = w / tot
    return W.astype(np.float32)


# ----------------------------------------------------------------------------
# Pallas kernel: per-batch slab, two bf16 MXU matmuls (f32 accumulation),
# one f32 bias add, one unmasked lane-dense store.
# ----------------------------------------------------------------------------
def _pointwise_resize_kernel(x_ref, g_ref, wh_ref, b_ref, o_ref):
    # x_ref : VMEM (1, H, Cin*W)  bf16   per-batch input slab, cols (ci, w)
    # g_ref : VMEM (Cin*W, Npad)  bf16   fused 1x1-conv + column-resize weights
    # wh_ref: VMEM (dim1, H)      bf16   row-resize weights
    # b_ref : VMEM (1, Npad)      f32    bias row (bias[co] tiled over q, zero pad)
    # o_ref : VMEM (1, dim1, Npad) f32   lane-dense output slab
    d = jnp.dot(x_ref[0], g_ref[...], preferred_element_type=jnp.float32)   # (H, Npad)
    out = jnp.dot(wh_ref[...], d.astype(jnp.bfloat16),
                  preferred_element_type=jnp.float32)                        # (dim1, Npad)
    o_ref[0] = (out + b_ref[...]).astype(o_ref.dtype)


# ----------------------------------------------------------------------------
# Factory: one-time weight preprocessing + jitted per-call wrapper.
# ----------------------------------------------------------------------------
def make_pointwise_op_2d(conv_w, conv_b, H, W, dim1, dim2):
    """conv_w: (Cout, Cin, 1, 1); conv_b: (Cout,).  Returns apply(x)->out."""
    conv_w = np.asarray(jax.device_get(conv_w), np.float32)
    conv_b = np.asarray(jax.device_get(conv_b), np.float32)
    Cout, Cin = conv_w.shape[0], conv_w.shape[1]
    wc = conv_w.reshape(Cout, Cin)

    # Data-independent resize matrices (host numpy, computed once).
    wh_np = resize_weight_matrix(H, dim1)          # (dim1, H)
    ww_np = resize_weight_matrix(W, dim2)          # (dim2, W)

    N = Cout * dim2
    Npad = ((N + 127) // 128) * 128                # lane-dense output width

    # Fuse 1x1 conv + column resize: G[(ci,w),(co,q)] = wc[co,ci] * ww[q,w].
    g_np = np.einsum("oc,qw->cwoq", wc, ww_np).reshape(Cin * W, N)
    g_pad = np.zeros((Cin * W, Npad), np.float32)
    g_pad[:, :N] = g_np

    # Bias row over (co, q); exact to add post-resize since rows sum to 1.
    brow_np = np.zeros((1, Npad), np.float32)
    brow_np[0, :N] = np.repeat(conv_b, dim2)

    g_dev = jnp.asarray(g_pad, jnp.bfloat16)       # (Cin*W, Npad)
    wh_dev = jnp.asarray(wh_np, jnp.bfloat16)      # (dim1, H)
    brow_dev = jnp.asarray(brow_np, jnp.float32)   # (1, Npad)

    CinW = Cin * W

    @jax.jit
    def apply(x):
        B = x.shape[0]
        # (B, Cin, H, W) -> (B, H, Cin*W): batch on the grid, lanes = (ci, w).
        xr = jnp.transpose(x, (0, 2, 1, 3)).reshape(B, H, CinW).astype(jnp.bfloat16)

        out_slab = pl.pallas_call(
            _pointwise_resize_kernel,
            out_shape=jax.ShapeDtypeStruct((B, dim1, Npad), jnp.float32),
            grid=(B,),
            in_specs=[
                pl.BlockSpec((1, H, CinW), lambda b: (b, 0, 0)),   # x (per batch)
                pl.BlockSpec((CinW, Npad), lambda b: (0, 0)),      # G (resident)
                pl.BlockSpec((dim1, H), lambda b: (0, 0)),         # Wh (resident)
                pl.BlockSpec((1, Npad), lambda b: (0, 0)),         # bias (resident)
            ],
            out_specs=pl.BlockSpec((1, dim1, Npad), lambda b: (b, 0, 0)),
            compiler_params=pltpu.CompilerParams(
                dimension_semantics=("parallel",)),
        )(xr, g_dev, wh_dev, brow_dev)

        # (B, dim1, Cout, dim2) -> (B, Cout, dim1, dim2): layout plumbing in XLA.
        out = out_slab[:, :, :N].reshape(B, dim1, Cout, dim2)
        return jnp.transpose(out, (0, 2, 1, 3))

    return apply


# ----------------------------------------------------------------------------
if __name__ == "__main__":
    # Module config: in_codim=4, out_codim=8, dim1=dim2=24 (output grid size).
    B, Cin, H, W = 2, 4, 16, 16
    Cout, dim1, dim2 = 8, 24, 24

    key = jax.random.PRNGKey(0)
    kx, kw, kb = jax.random.split(key, 3)

    x = jax.random.normal(kx, (B, Cin, H, W), dtype=jnp.float32)

    # Conv2d-default-style init: kaiming_uniform(a=sqrt(5)) => U(-1/sqrt(fan_in), ...)
    fan_in = Cin * 1 * 1
    bound = 1.0 / math.sqrt(fan_in)
    conv_w = jax.random.uniform(kw, (Cout, Cin, 1, 1), jnp.float32, -bound, bound)
    conv_b = jax.random.uniform(kb, (Cout,), jnp.float32, -bound, bound)

    pointwise_op_2d = make_pointwise_op_2d(conv_w, conv_b, H, W, dim1, dim2)

    out = pointwise_op_2d(x)
    out = jax.block_until_ready(out)
    assert out.shape == (B, Cout, dim1, dim2), out.shape

    # Pure-JAX f32 reference using the same precomputed resize matrices
    # (conv + bias, then separable resize, as the PyTorch module orders it).
    wh_ref = jnp.asarray(resize_weight_matrix(H, dim1))
    ww_ref = jnp.asarray(resize_weight_matrix(W, dim2))
    z = jnp.einsum("oi,bihw->bohw", conv_w.reshape(Cout, Cin), x) + conv_b[None, :, None, None]
    ref = jnp.einsum("ph,bohw,qw->bopq", wh_ref, z, ww_ref)

    # Tolerance reflects bf16 operand quantization (accumulation is f32).
    if not jnp.allclose(out, ref, rtol=2e-2, atol=2e-2):
        max_err = float(jnp.max(jnp.abs(out - ref)))
        raise AssertionError(f"Pallas kernel mismatch vs reference, max abs err = {max_err}")

    print("KERNEL_OK")
</pallas_src>

<mosaic_0001>
module attributes {stable_mosaic.version = 11 : i64} {
  func.func @_pointwise_resize_kernel(%arg0: i32, %arg1: memref<1x16x64xbf16, #tpu.memory_space<vmem>>, %arg2: memref<64x256xbf16, #tpu.memory_space<vmem>>, %arg3: memref<24x16xbf16, #tpu.memory_space<vmem>>, %arg4: memref<1x256xf32, #tpu.memory_space<vmem>>, %arg5: memref<1x24x256xf32, #tpu.memory_space<vmem>>) attributes {dimension_semantics = [#tpu.dimension_semantics<parallel>], iteration_bounds = array<i64: 2>, scalar_prefetch = 0 : i64, scratch_operands = 0 : i64, tpu.core_type = #tpu.core_type<tc>, window_params = [{transform_indices = @transform_0, window_bounds = array<i64: 1, 16, 64>}, {pipeline_mode = #tpu.pipeline_mode<synchronous>, transform_indices = @transform_1, window_bounds = array<i64: 64, 256>}, {pipeline_mode = #tpu.pipeline_mode<synchronous>, transform_indices = @transform_2, window_bounds = array<i64: 24, 16>}, {pipeline_mode = #tpu.pipeline_mode<synchronous>, transform_indices = @transform_3, window_bounds = array<i64: 1, 256>}, {transform_indices = @transform_4, window_bounds = array<i64: 1, 24, 256>}]} {
    %c0 = arith.constant 0 : index
    %c0_0 = arith.constant 0 : index
    %c0_1 = arith.constant 0 : index
    %0 = vector.load %arg1[%c0, %c0_0, %c0_1] : memref<1x16x64xbf16, #tpu.memory_space<vmem>>, vector<1x16x64xbf16>
    %1 = vector.shape_cast %0 : vector<1x16x64xbf16> to vector<16x64xbf16>
    %c0_2 = arith.constant 0 : index
    %c0_3 = arith.constant 0 : index
    %2 = vector.load %arg2[%c0_2, %c0_3] : memref<64x256xbf16, #tpu.memory_space<vmem>>, vector<64x256xbf16>
    %cst = arith.constant dense<0.000000e+00> : vector<16x256xf32>
    %3 = tpu.matmul %1, %2, %cst {dimension_numbers = #tpu.dot_dimension_numbers<[1], [0], [0], [1], [0, 0, 1, 1], [], []>} : vector<16x64xbf16>, vector<64x256xbf16>, vector<16x256xf32> -> vector<16x256xf32>
    %c0_4 = arith.constant 0 : index
    %c0_5 = arith.constant 0 : index
    %4 = vector.load %arg3[%c0_4, %c0_5] : memref<24x16xbf16, #tpu.memory_space<vmem>>, vector<24x16xbf16>
    %5 = arith.truncf %3 : vector<16x256xf32> to vector<16x256xbf16>
    %cst_6 = arith.constant dense<0.000000e+00> : vector<24x256xf32>
    %6 = tpu.matmul %4, %5, %cst_6 {dimension_numbers = #tpu.dot_dimension_numbers<[1], [0], [0], [1], [0, 0, 1, 1], [], []>} : vector<24x16xbf16>, vector<16x256xbf16>, vector<24x256xf32> -> vector<24x256xf32>
    %c0_7 = arith.constant 0 : index
    %c0_8 = arith.constant 0 : index
    %7 = vector.load %arg4[%c0_7, %c0_8] : memref<1x256xf32, #tpu.memory_space<vmem>>, vector<1x256xf32>
    %8 = vector.broadcast %7 : vector<1x256xf32> to vector<24x256xf32>
    %9 = arith.addf %6, %8 : vector<24x256xf32>
    %c0_9 = arith.constant 0 : index
    %c0_10 = arith.constant 0 : index
    %c0_11 = arith.constant 0 : index
    %10 = vector.load %arg5[%c0_9, %c0_10, %c0_11] : memref<1x24x256xf32, #tpu.memory_space<vmem>>, vector<1x24x256xf32>
    %11 = vector.shape_cast %10 : vector<1x24x256xf32> to vector<24x256xf32>
    %12 = vector.shape_cast %9 : vector<24x256xf32> to vector<1x24x256xf32>
    tpu.vector_store %arg5[%c0_9, %c0_10, %c0_11], %12 {strides = array<i32>} : memref<1x24x256xf32, #tpu.memory_space<vmem>>, vector<1x24x256xf32>,
    return
  }
  func.func @transform_0(%arg0: i32) -> (i32, i32, i32) {
    %c0_i32 = arith.constant 0 : i32
    %c0_i32_0 = arith.constant 0 : i32
    %c0_i32_1 = arith.constant 0 : i32
    return %arg0, %c0_i32, %c0_i32_0 : i32, i32, i32
  }
  func.func @transform_1(%arg0: i32) -> (i32, i32) {
    %c0_i32 = arith.constant 0 : i32
    %c0_i32_0 = arith.constant 0 : i32
    %c0_i32_1 = arith.constant 0 : i32
    return %c0_i32, %c0_i32_0 : i32, i32
  }
  func.func @transform_2(%arg0: i32) -> (i32, i32) {
    %c0_i32 = arith.constant 0 : i32
    %c0_i32_0 = arith.constant 0 : i32
    %c0_i32_1 = arith.constant 0 : i32
    return %c0_i32, %c0_i32_0 : i32, i32
  }
  func.func @transform_3(%arg0: i32) -> (i32, i32) {
    %c0_i32 = arith.constant 0 : i32
    %c0_i32_0 = arith.constant 0 : i32
    %c0_i32_1 = arith.constant 0 : i32
    return %c0_i32, %c0_i32_0 : i32, i32
  }
  func.func @transform_4(%arg0: i32) -> (i32, i32, i32) {
    %c0_i32 = arith.constant 0 : i32
    %c0_i32_0 = arith.constant 0 : i32
    %c0_i32_1 = arith.constant 0 : i32
    return %arg0, %c0_i32, %c0_i32_0 : i32, i32, i32
  }
}

</mosaic_0001>

<llo_original>
// kernel: apply.1
$region0: #{apply.1}
  #allocation0 [shape = 'u32[]', space=smem, size = 0x4, offset = 0x4, fixed_abs, tag = 'smem constant byte address 0x4 - core index']
  #allocation1 [shape = 'u32[144,128]{1,0:T(1,128)}', space=vmem, size = 0x12000, scoped, tag = 'internal scratch']
  %s0 = inlined_call_operand.vmem [shape: bf16[2,16,64], index: 0, kind: input, shape index: {}]
  %s1 = inlined_call_operand.vmem [shape: bf16[64,256], index: 1, kind: input, shape index: {}]
  %s2 = inlined_call_operand.vmem [shape: bf16[24,16], index: 2, kind: input, shape index: {}]
  %s3 = inlined_call_operand.vmem [shape: f32[1,256], index: 3, kind: input, shape index: {}]
  %s4 = inlined_call_operand.vmem [shape: f32[2,24,256], index: 4, kind: output, shape index: {}]
  %s5 = sld [smem:[#allocation0]]
  $region49: #{apply.1} parent=0
    _
  %s7 = ssub.s32 1, %s5
  %s8 = scalar_select 0, %s7, %s5
  loop: start=0, step=1, limit=4
  $region2: #{apply.1} parent=0 // loop_pre_header
    _
  $region3: #{apply.1} parent=0 // loop_header
    %s10 = sphi 0, %s14
    %p11 = scmp.ge.s32.totalorder %s10, 4
    %s20 = sphi 0, %s22
    %s23 = sphi 0, %s20
    %s24 = sphi 0, %s23
    %s40 = sphi 0, %s24
    %s44 = sphi 0, %s44
    %s46 = sphi 0, %s44
    %s47 = sphi 0, %s46
    %s61 = sphi 0, %s47
    %s65 = sphi 0, %s65
    %s67 = sphi 0, %s65
    %s68 = sphi 0, %s67
    %s82 = sphi 0, %s68
    %s86 = sphi 0, %s86
    %s88 = sphi 0, %s86
    %s89 = sphi 0, %s88
    %s103 = sphi 0, %s89
    %s109 = sphi 0, %s111
    %s112 = sphi 0, %s109
    %s113 = sphi 0, %s112
    %s129 = sphi 0, %s113
  $region4: #{apply.1} parent=0 // loop_header_branch
    %13 = sbr.rel (%p11) target = $region8
  $region5: #{apply.1} parent=0 // loop_body
    %s15 = ssub.s32 %s10, 1
    %s16 = ssub.s32 %s10, 2
    %s17 = sadd.s32 %s10, 1
    %s18 = ssub.s32 %s10, %s17
    %p19 = scmp.eq.s32.totalorder %s18, 0
    %s21 = sadd.s32 %s20, 1
    %s22 = scalar_select %p19, %s20, %s21
    %p25 = pneg %p19
    %p26 = scmp.eq.s32.totalorder %s10, 1
    %p27 = por %p25, %p26
    %p28 = scmp.ne.s32.totalorder %s20, %s23
    %p29 = scmp.eq.s32.totalorder %s10, 0
    %p30 = por %p28, %p29
    %p31 = scmp.ne.s32.totalorder %s20, %s23
    %p32 = scmp.eq.s32.totalorder %s15, 1
    %p33 = por %p31, %p32
    %p34 = scmp.ne.s32.totalorder %s23, %s24
    %p35 = scmp.eq.s32.totalorder %s15, 0
    %p36 = por %p34, %p35
    %p37 = scmp.ne.s32.totalorder %s23, %s24
    %p38 = scmp.eq.s32.totalorder %s16, 1
    %p39 = por %p37, %p38
    %p41 = scmp.ne.s32.totalorder %s24, %s40
    %p42 = scmp.eq.s32.totalorder %s16, 0
    %p43 = por %p41, %p42
    %s45 = sadd.s32 %s44, 1
    %p48 = scmp.eq.s32.totalorder %s10, 1
    %p49 = scmp.ne.s32.totalorder %s44, %s46
    %p50 = scmp.eq.s32.totalorder %s10, 0
    %p51 = por %p49, %p50
    %p52 = scmp.ne.s32.totalorder %s44, %s46
    %p53 = scmp.eq.s32.totalorder %s15, 1
    %p54 = por %p52, %p53
    %p55 = scmp.ne.s32.totalorder %s46, %s47
    %p56 = scmp.eq.s32.totalorder %s15, 0
    %p57 = por %p55, %p56
    %p58 = scmp.ne.s32.totalorder %s46, %s47
    %p59 = scmp.eq.s32.totalorder %s16, 1
    %p60 = por %p58, %p59
    %p62 = scmp.ne.s32.totalorder %s47, %s61
    %p63 = scmp.eq.s32.totalorder %s16, 0
    %p64 = por %p62, %p63
    %s66 = sadd.s32 %s65, 1
    %p69 = scmp.eq.s32.totalorder %s10, 1
    %p70 = scmp.ne.s32.totalorder %s65, %s67
    %p71 = scmp.eq.s32.totalorder %s10, 0
    %p72 = por %p70, %p71
    %p73 = scmp.ne.s32.totalorder %s65, %s67
    %p74 = scmp.eq.s32.totalorder %s15, 1
    %p75 = por %p73, %p74
    %p76 = scmp.ne.s32.totalorder %s67, %s68
    %p77 = scmp.eq.s32.totalorder %s15, 0
    %p78 = por %p76, %p77
    %p79 = scmp.ne.s32.totalorder %s67, %s68
    %p80 = scmp.eq.s32.totalorder %s16, 1
    %p81 = por %p79, %p80
    %p83 = scmp.ne.s32.totalorder %s68, %s82
    %p84 = scmp.eq.s32.totalorder %s16, 0
    %p85 = por %p83, %p84
    %s87 = sadd.s32 %s86, 1
    %p90 = scmp.eq.s32.totalorder %s10, 1
    %p91 = scmp.ne.s32.totalorder %s86, %s88
    %p92 = scmp.eq.s32.totalorder %s10, 0
    %p93 = por %p91, %p92
    %p94 = scmp.ne.s32.totalorder %s86, %s88
    %p95 = scmp.eq.s32.totalorder %s15, 1
    %p96 = por %p94, %p95
    %p97 = scmp.ne.s32.totalorder %s88, %s89
    %p98 = scmp.eq.s32.totalorder %s15, 0
    %p99 = por %p97, %p98
    %p100 = scmp.ne.s32.totalorder %s88, %s89
    %p101 = scmp.eq.s32.totalorder %s16, 1
    %p102 = por %p100, %p101
    %p104 = scmp.ne.s32.totalorder %s89, %s103
    %p105 = scmp.eq.s32.totalorder %s16, 0
    %p106 = por %p104, %p105
    %s107 = ssub.s32 %s10, %s17
    %p108 = scmp.eq.s32.totalorder %s107, 0
    %s110 = sadd.s32 %s109, 1
    %s111 = scalar_select %p108, %s109, %s110
    %p114 = pneg %p108
    %p115 = scmp.eq.s32.totalorder %s10, 1
    %p116 = por %p114, %p115
    %p117 = scmp.ne.s32.totalorder %s109, %s112
    %p118 = scmp.eq.s32.totalorder %s10, 0
    %p119 = por %p117, %p118
    %p120 = scmp.ne.s32.totalorder %s109, %s112
    %p121 = scmp.eq.s32.totalorder %s15, 1
    %p122 = por %p120, %p121
    %p123 = scmp.ne.s32.totalorder %s112, %s113
    %p124 = scmp.eq.s32.totalorder %s15, 0
    %p125 = por %p123, %p124
    %p126 = scmp.ne.s32.totalorder %s112, %s113
    %p127 = scmp.eq.s32.totalorder %s16, 1
    %p128 = por %p126, %p127
    %p130 = scmp.ne.s32.totalorder %s113, %s129
    %p131 = scmp.eq.s32.totalorder %s16, 0
    %p132 = por %p130, %p131
    %p133 = scmp.le.s32.totalorder 1, %s10
    %p134 = scmp.lt.s32.totalorder %s10, 3
    %p135 = pnand %p133, %p134
    %p136 = pneg %p135
    // Predicated region
    $region9: #{apply.1} parent=5 // pred_check
      _
    $region10: #{apply.1} parent=5 // pred_check_branch
      %138 = sbr.rel (%p135) target = $region12
    $region11: #{apply.1} parent=5 // pred_region
      %s139 = ssub.s32 %s10, 1
      // Predicated region
      $region13: #{apply.1} parent=11 // pred_check
        %p140 = pneg %p57
      $region14: #{apply.1} parent=11 // pred_check_branch
        %142 = sbr.rel (%p140) target = $region16
      $region15: #{apply.1} parent=11 // pred_region
        _
      $region16: #{apply.1} parent=11 // pred_fallthru
        _
      // Predicated region
      $region17: #{apply.1} parent=11 // pred_check
        %p143 = pneg %p78
      $region18: #{apply.1} parent=11 // pred_check_branch
        %145 = sbr.rel (%p143) target = $region20
      $region19: #{apply.1} parent=11 // pred_region
        _
      $region20: #{apply.1} parent=11 // pred_fallthru
        _
      // Predicated region
      $region21: #{apply.1} parent=11 // pred_check
        %p146 = pneg %p99
      $region22: #{apply.1} parent=11 // pred_check_branch
        %148 = sbr.rel (%p146) target = $region24
      $region23: #{apply.1} parent=11 // pred_region
        _
      $region24: #{apply.1} parent=11 // pred_fallthru
        _
    $region12: #{apply.1} parent=5 // pred_fallthru
      _
    %p149 = scmp.lt.s32.totalorder %s10, 2
    // Predicated region
    $region25: #{apply.1} parent=5 // pred_check
      %p150 = pneg %p149
    $region26: #{apply.1} parent=5 // pred_check_branch
      %152 = sbr.rel (%p150) target = $region28
    $region27: #{apply.1} parent=5 // pred_region
      // Predicated region
      $region29: #{apply.1} parent=27 // pred_check
        %p153 = pneg %p30
      $region30: #{apply.1} parent=27 // pred_check_branch
        %155 = sbr.rel (%p153) target = $region32
      $region31: #{apply.1} parent=27 // pred_region
        %p156 = scmp.lt.s32.totalorder %s10, 1
        %s157 = scalar_select %p156, %s10, 1
        %s158 = smul.addr %s157, 2
        %s159 = smul.addr %s158, 4
        %s160 = scalar_lea.vmem %s0, %s159
      $region32: #{apply.1} parent=27 // pred_fallthru
        _
    $region28: #{apply.1} parent=5 // pred_fallthru
      _
    %p161 = scmp.le.s32.totalorder 1, %s10
    %p162 = scmp.lt.s32.totalorder %s10, 3
    %p163 = pnand %p161, %p162
    %p164 = pneg %p163
    // Predicated region
    $region33: #{apply.1} parent=5 // pred_check
      _
    $region34: #{apply.1} parent=5 // pred_check_branch
      %166 = sbr.rel (%p163) target = $region36
    $region35: #{apply.1} parent=5 // pred_region
      %s167 = ssub.s32 %s10, 1
      %p168 = scmp.lt.s32.totalorder %s15, 1
      %s169 = scalar_select %p168, %s15, 1
      %s170 = smul.addr %s169, 2
      %s171 = smul.addr %s170, 4
      %s172 = scalar_lea.vmem %s0, %s171
      %p173 = pneg %p36
      %p174 = pneg %p33
      %p175 = pneg %p57
      %p176 = pneg %p54
      %p177 = pneg %p78
      %p178 = pneg %p75
      %p179 = pneg %p99
      %p180 = pneg %p96
      %p181 = pneg %p125
      %p182 = pneg %p122
      %p183 = scmp.lt.s32.totalorder %s15, 1
      %s184 = scalar_select %p183, %s15, 1
      %s185 = smul.addr %s184, 6
      %s186 = smul.addr %s185, 8
      %s187 = scalar_lea.vmem %s4, %s186
      %p188 = scmp.lt.s32.totalorder %s15, 1
      %s189 = scalar_select %p188, %s15, 1
      %s190 = smul.addr %s189, 2
      %s191 = smul.addr %s190, 4
      %s192 = scalar_lea.vmem %s0, %s191
      %p193 = scmp.lt.s32.totalorder %s15, 1
      %s194 = scalar_select %p193, %s15, 1
      %s195 = smul.addr %s194, 6
      %s196 = smul.addr %s195, 8
      %s197 = scalar_lea.vmem %s4, %s196
      %v199 = vld [vmem:[%s192] sm:$0xf]
      %v200 = vld [vmem:[%s192 + $0x4] sm:$0xf]
      %v201 = vld [vmem:[%s1] sm:$0xff]
      %v202 = vld [vmem:[%s1 + $0x8] sm:$0xff]
      %v203 = vld [vmem:[%s1 + $0x10] sm:$0xff]
      %v204 = vld [vmem:[%s1 + $0x18] sm:$0xff]
      %v205 = vld [vmem:[%s1 + $0x20] sm:$0xff]
      %v206 = vld [vmem:[%s1 + $0x28] sm:$0xff]
      %v207 = vld [vmem:[%s1 + $0x30] sm:$0xff]
      %v208 = vld [vmem:[%s1 + $0x38] sm:$0xff]
      %v211 = vunpack.c.l.b16 %v199
      %v212 = vunpack.c.l.b16 %v200
      %v213 = vpack.c.b16 %v212, %v211
      %v222 = vunpack.c.l.b16 %v201
      %v223 = vunpack.c.h.b16 %v201
      %v224 = vunpack.c.l.b16 %v202
      %v225 = vunpack.c.h.b16 %v202
      %v226 = vunpack.c.l.b16 %v203
      %v227 = vunpack.c.h.b16 %v203
      %v228 = vunpack.c.l.b16 %v204
      %v229 = vunpack.c.h.b16 %v204
      %v230 = vunpack.c.l.b16 %v205
      %v231 = vunpack.c.h.b16 %v205
      %v232 = vunpack.c.l.b16 %v206
      %v233 = vunpack.c.h.b16 %v206
      %v234 = vunpack.c.l.b16 %v207
      %v235 = vunpack.c.h.b16 %v207
      %v236 = vunpack.c.l.b16 %v208
      %v237 = vunpack.c.h.b16 %v208
      %v238 = vpack.c.b16 %v224, %v222
      %v239 = vpack.c.b16 %v225, %v223
      %v240 = vpack.c.b16 %v228, %v226
      %v241 = vpack.c.b16 %v229, %v227
      %v242 = vpack.c.b16 %v232, %v230
      %v243 = vpack.c.b16 %v233, %v231
      %v244 = vpack.c.b16 %v236, %v234
      %v245 = vpack.c.b16 %v237, %v235
      %vm254 = vcmask 523264
      %v256 = vsel %vm254, %v213, 0
      %258 = vmatprep.subr.bf16.mxu0 0
      %259 = vmatpush1.bf16.msra.mxu0 0
      %260 = vmatprep.subr.bf16.mxu0 0
      %261 = vmatpush1.bf16.msra.mxu0 0
      %262 = vmatprep.subr.bf16.mxu0 0
      %263 = vmatpush1.bf16.msra.mxu0 0
      %264 = vmatprep.subr.bf16.mxu0 0
      %265 = vmatpush1.bf16.msra.mxu0 0
      %266 = vmatprep.subr.bf16.mxu0 %v245
      %267 = vmatpush1.bf16.msra.mxu0 %v244
      %268 = vmatprep.subr.bf16.mxu0 %v243
      %269 = vmatpush1.bf16.msra.mxu0 %v242
      %270 = vmatprep.subr.bf16.mxu0 %v241
      %271 = vmatpush1.bf16.msra.mxu0 %v240
      %272 = vmatprep.subr.bf16.mxu0 %v239
      %273 = vmatpush1.bf16.msra.mxu0 %v238
      %274 = vmatprep.subr.bf16.mxu0 0
      %275 = vmatpush2.bf16.msra.mxu0 0
      %276 = vmatprep.subr.bf16.mxu0 0
      %277 = vmatpush2.bf16.msra.mxu0 0
      %278 = vmatprep.subr.bf16.mxu0 0
      %279 = vmatpush2.bf16.msra.mxu0 0
      %280 = vmatprep.subr.bf16.mxu0 0
      %281 = vmatpush2.bf16.msra.mxu0 0
      %282 = vmatprep.subr.bf16.mxu0 0
      %283 = vmatpush2.bf16.msra.mxu0 0
      %284 = vmatprep.subr.bf16.mxu0 0
      %285 = vmatpush2.bf16.msra.mxu0 0
      %286 = vmatprep.subr.bf16.mxu0 0
      %287 = vmatpush2.bf16.msra.mxu0 0
      %288 = vmatprep.subr.bf16.mxu0 0
      %289 = vmatpush2.bf16.msra.mxu0 0
      %290 = vmatprep.mubr.bf16.mxu0 0
      %291 = vmatmul.mubr.bf16.gmra.mxu0 %v256
      %v292 = vpop.f32.mrf.mxu0
      %v293 = vadd.f32 0.0, %v292
      %v294 = vpop.f32.mrf.mxu0
      %v295 = vadd.f32 0.0, %v294
      %v296 = vpop.f32.mrf.mxu0
      %v297 = vadd.f32 0.0, %v296
      %v298 = vpop.f32.mrf.mxu0
      %v299 = vadd.f32 0.0, %v298
      %300 = vdwg.mxu0
      %v301 = vld [vmem:[%s2] sm:$0xf]
      %v302 = vld [vmem:[%s2 + $0x4] sm:$0xf]
      %v303 = vld [vmem:[%s2 + $0x8] sm:$0xf]
      %v304 = vpack.c.bf16 %v297, %v293
      %v305 = vpack.c.bf16 %v299, %v295
      %v306 = vld [vmem:[%s3] sm:$0x3]
      %v308 = vlaneseq
      %v309 = vshrl.u32 %v308, 7
      %v310 = vsub.s32 0, %v309
      %v311 = vrot.slane %v306, %v310
      %v312 = vlaneseq
      %v313 = vshrl.u32 %v312, 7
      %v314 = vsub.s32 1, %v313
      %v315 = vrot.slane %v306, %v314
      %v321 = vunpack.c.l.b16 %v301
      %v322 = vunpack.c.l.b16 %v302
      %v323 = vunpack.c.l.b16 %v303
      %v324 = vpack.c.b16 %v322, %v321
      %v325 = vpack.c.b16 %v323, %v323
      %vm326 = vcmask 130048
      %v328 = vsel %vm326, %v324, 0
      %v331 = vsel %vm326, %v325, 0
      %333 = vmatprep.subr.bf16.mxu0 0
      %334 = vmatpush1.bf16.msra.mxu0 0
      %335 = vmatprep.subr.bf16.mxu0 0
      %336 = vmatpush1.bf16.msra.mxu0 0
      %337 = vmatprep.subr.bf16.mxu0 0
      %338 = vmatpush1.bf16.msra.mxu0 0
      %339 = vmatprep.subr.bf16.mxu0 0
      %340 = vmatpush1.bf16.msra.mxu0 0
      %341 = vmatprep.subr.bf16.mxu0 0
      %342 = vmatpush1.bf16.msra.mxu0 0
      %343 = vmatprep.subr.bf16.mxu0 0
      %344 = vmatpush1.bf16.msra.mxu0 0
      %345 = vmatprep.subr.bf16.mxu0 0
      %346 = vmatpush1.bf16.msra.mxu0 0
      %347 = vmatprep.subr.bf16.mxu0 %v305
      %348 = vmatpush1.bf16.msra.mxu0 %v304
      %349 = vmatprep.subr.bf16.mxu0 0
      %350 = vmatpush2.bf16.msra.mxu0 0
      %351 = vmatprep.subr.bf16.mxu0 0
      %352 = vmatpush2.bf16.msra.mxu0 0
      %353 = vmatprep.subr.bf16.mxu0 0
      %354 = vmatpush2.bf16.msra.mxu0 0
      %355 = vmatprep.subr.bf16.mxu0 0
      %356 = vmatpush2.bf16.msra.mxu0 0
      %357 = vmatprep.subr.bf16.mxu0 0
      %358 = vmatpush2.bf16.msra.mxu0 0
      %359 = vmatprep.subr.bf16.mxu0 0
      %360 = vmatpush2.bf16.msra.mxu0 0
      %361 = vmatprep.subr.bf16.mxu0 0
      %362 = vmatpush2.bf16.msra.mxu0 0
      %363 = vmatprep.subr.bf16.mxu0 0
      %364 = vmatpush2.bf16.msra.mxu0 0
      %365 = vmatprep.mubr.bf16.mxu0 0
      %366 = vmatmul.mubr.bf16.gmra.mxu0 %v328
      %v367 = vpop.f32.mrf.mxu0
      %v368 = vadd.f32 %v311, %v367
      %v369 = vpop.f32.mrf.mxu0
      %v370 = vadd.f32 %v315, %v369
      %v371 = vpop.f32.mrf.mxu0
      %v372 = vadd.f32 %v311, %v371
      %v373 = vpop.f32.mrf.mxu0
      %v374 = vadd.f32 %v315, %v373
      %375 = vmatprep.mubr.bf16.mxu0 0
      %376 = vmatmul.mubr.bf16.gmra.mxu0 %v331
      %v377 = vpop.f32.mrf.mxu0
      %v378 = vadd.f32 %v311, %v377
      %v379 = vpop.f32.mrf.mxu0
      %v380 = vadd.f32 %v315, %v379
      %v381 = vpop.f32.mrf.mxu0
      %v382 = vpop.f32.mrf.mxu0
      %383 = vdwg.mxu0
      %384 = vst [vmem:[%s197] sm:$0xff] %v368
      %385 = vst [vmem:[%s197 + $0x8] sm:$0xff] %v370
      %386 = vst [vmem:[%s197 + $0x10] sm:$0xff] %v372
      %387 = vst [vmem:[%s197 + $0x18] sm:$0xff] %v374
      %388 = vst [vmem:[%s197 + $0x20] sm:$0xff] %v378
      %389 = vst [vmem:[%s197 + $0x28] sm:$0xff] %v380
      %p390 = scmp.lt.s32.totalorder %s15, 1
      %s391 = scalar_select %p390, %s15, 1
      %s392 = smul.addr %s391, 6
      %s393 = smul.addr %s392, 8
      %s394 = scalar_lea.vmem %s4, %s393
      // Predicated region
      $region37: #{apply.1} parent=35 // pred_check
        %p395 = pneg %p122
      $region38: #{apply.1} parent=35 // pred_check_branch
        %397 = sbr.rel (%p395) target = $region40
      $region39: #{apply.1} parent=35 // pred_region
        _
      $region40: #{apply.1} parent=35 // pred_fallthru
        _
    $region36: #{apply.1} parent=5 // pred_fallthru
      _
    %p398 = scmp.le.s32.totalorder 2, %s10
    // Predicated region
    $region41: #{apply.1} parent=5 // pred_check
      %p399 = pneg %p398
    $region42: #{apply.1} parent=5 // pred_check_branch
      %401 = sbr.rel (%p399) target = $region44
    $region43: #{apply.1} parent=5 // pred_region
      %s402 = ssub.s32 %s10, 2
      // Predicated region
      $region45: #{apply.1} parent=43 // pred_check
        %p403 = pneg %p128
      $region46: #{apply.1} parent=43 // pred_check_branch
        %405 = sbr.rel (%p403) target = $region48
      $region47: #{apply.1} parent=43 // pred_region
        %p406 = scmp.lt.s32.totalorder %s16, 1
        %s407 = scalar_select %p406, %s16, 1
        %s408 = smul.addr %s407, 6
        %s409 = smul.addr %s408, 8
        %s410 = scalar_lea.vmem %s4, %s409
      $region48: #{apply.1} parent=43 // pred_fallthru
        _
    $region44: #{apply.1} parent=5 // pred_fallthru
      _
  $region6: #{apply.1} parent=0 // loop_footer
    %s14 = sadd.s32 1, %s10
  $region7: #{apply.1} parent=0 // loop_footer_branch
    %9 = sbr.rel target = $region3
  $region8: #{apply.1} parent=0 // loop_exit
    _

</llo_original>
